<compile_context>
chip_gen: v5e
topology: v5e:2x2
jax: 0.10.0
libtpu: 0.0.40
codegen_flags: <defaults>
</compile_context>

<pallas_src>
import math

import jax
import jax.numpy as jnp
from jax.experimental import pallas as pl
from jax.experimental.pallas import tpu as pltpu


def make_mha_kernel(num_heads, mid_features, seq_len):
    """Fused MHA kernel: QKV projection + per-head attention + accumulated
    output projection for `bb` batch elements per grid step."""
    H, mid, S = num_heads, mid_features, seq_len
    F = H * mid

    def kernel(x_ref, wqkv_ref, bqkv_ref, wp_ref, bp_ref, o_ref):
        rows, Din = x_ref.shape                       # rows = bb * S
        bb = rows // S
        Dout = wp_ref.shape[1]

        # One stacked projection for Q, K, V of all heads: (bb*S, 3F).
        # (1/sqrt(mid) is already folded into the Q columns at pack time.)
        qkv = (jnp.dot(x_ref[...], wqkv_ref[...],
                       preferred_element_type=jnp.float32) + bqkv_ref[...])
        qkv = qkv.reshape(bb, S, 3 * F)               # leading-dim split: free

        wp = wp_ref[...]                              # (F, Dout), resident

        # Accumulate the output projection per head -- no concatenate.
        acc = jnp.zeros((bb * S, Dout), jnp.float32)

        # H is tiny -> static unroll; all contractions are batched over bb.
        for h in range(H):
            lo = h * mid
            qh = qkv[:, :, lo:lo + mid]               # (bb, S, mid)
            kh = qkv[:, :, F + lo:F + lo + mid]       # (bb, S, mid)
            vh = qkv[:, :, 2 * F + lo:2 * F + lo + mid]

            # scores: contract the feature axis directly (no kh.T).
            s = jax.lax.dot_general(
                qh, kh, (((2,), (2,)), ((0,), (0,))),
                preferred_element_type=jnp.float32)   # (bb, S, S)

            # numerically stable softmax along keys (exact normalization)
            s = s - jnp.max(s, axis=-1, keepdims=True)
            p = jnp.exp(s)
            p = p / jnp.sum(p, axis=-1, keepdims=True)

            oh = jax.lax.dot_general(
                p, vh, (((2,), (1,)), ((0,), (0,))),
                preferred_element_type=jnp.float32)   # (bb, S, mid)

            # per-head chunk of the output projection; row-slice of Wp is a
            # static, sublane-aligned (mid = multiple of 8) slice.
            acc = acc + jnp.dot(oh.reshape(bb * S, mid),
                                wp[lo:lo + mid, :],
                                preferred_element_type=jnp.float32)

        # Only HBM write of the kernel: one (bb*S, Dout) slab.
        o_ref[...] = (acc + bp_ref[...]).astype(o_ref.dtype)

    return kernel


def pack_mha_params(params):
    """One-time packing of per-head weights (call once, reuse every forward).

    Layout:
      wqkv : (Din, 3F)  columns = [Q heads | K heads | V heads], head-major,
             with 1/sqrt(mid) folded into the Q columns.
      bqkv : (1, 3F)    matching bias (Q part scaled as well).
      wp   : (F, Dout), bp : (1, Dout)
    """
    H, Din, mid = params["wq"].shape
    F = H * mid
    scale = 1.0 / math.sqrt(float(mid))

    def stack_w(w):                                   # (H, Din, mid) -> (Din, F)
        return jnp.transpose(w, (1, 0, 2)).reshape(Din, F)

    wqkv = jnp.concatenate(
        [stack_w(params["wq"]) * scale, stack_w(params["wk"]),
         stack_w(params["wv"])], axis=-1).astype(jnp.float32)        # (Din, 3F)
    bqkv = jnp.concatenate(
        [params["bq"].reshape(-1) * scale, params["bk"].reshape(-1),
         params["bv"].reshape(-1)]).reshape(1, 3 * F).astype(jnp.float32)
    return {
        "wqkv": wqkv,
        "bqkv": bqkv,
        "wp": params["wp"].astype(jnp.float32),                      # (F, Dout)
        "bp": params["bp"].reshape(1, -1).astype(jnp.float32),       # (1, Dout)
        "num_heads": H,
        "mid": mid,
    }


def multi_head_attention(x, packed, batch_block=None):
    """x: (B, S, Din) float32.  `packed` from pack_mha_params()."""
    B, S, Din = x.shape
    H, mid = packed["num_heads"], packed["mid"]
    F = H * mid
    Dout = packed["wp"].shape[1]

    # batch_block=1 (default): grid=(B,) "parallel" -> feeds both v7x TCs.
    # On single-TC v5e/v6e, batch_block=B folds the batch into one grid step.
    bb = batch_block if batch_block is not None else 1
    assert B % bb == 0, "batch_block must divide the batch size"

    kernel = make_mha_kernel(H, mid, S)

    # Present x / out as 2-D row slabs (free, row-major reshapes in XLA) so
    # the kernel needs no layout-changing reshapes around its matmuls.
    x2d = x.reshape(B * S, Din)

    out2d = pl.pallas_call(
        kernel,
        out_shape=jax.ShapeDtypeStruct((B * S, Dout), jnp.float32),
        grid=(B // bb,),
        in_specs=[
            pl.BlockSpec((bb * S, Din), lambda b: (b, 0)),    # x rows  (per-b)
            pl.BlockSpec((Din, 3 * F), lambda b: (0, 0)),     # Wqkv  (resident)
            pl.BlockSpec((1, 3 * F), lambda b: (0, 0)),       # bqkv  (resident)
            pl.BlockSpec((F, Dout), lambda b: (0, 0)),        # Wp    (resident)
            pl.BlockSpec((1, Dout), lambda b: (0, 0)),        # bp    (resident)
        ],
        out_specs=pl.BlockSpec((bb * S, Dout), lambda b: (b, 0)),
        compiler_params=pltpu.CompilerParams(
            dimension_semantics=("parallel",)),
    )(x2d, packed["wqkv"], packed["bqkv"], packed["wp"], packed["bp"])

    return out2d.reshape(B, S, Dout)


# Pure-JAX reference (mirrors the PyTorch forward) for a correctness check.
def reference(x, params):
    H = params["wq"].shape[0]
    mid = params["wq"].shape[2]
    heads = []
    for h in range(H):
        q = x @ params["wq"][h] + params["bq"][h]
        k = x @ params["wk"][h] + params["bk"][h]
        v = x @ params["wv"][h] + params["bv"][h]
        m = (q @ jnp.swapaxes(k, -1, -2)) / jnp.sqrt(jnp.float32(mid))
        m = jax.nn.softmax(m, axis=-1)
        heads.append(m @ v)
    cat = jnp.concatenate(heads, axis=-1)
    return cat @ params["wp"] + params["bp"]


if __name__ == "__main__":
    # Small shapes consistent with the module.
    B, S = 2, 8
    in_features, mid_features, num_heads = 32, 8, 4

    key = jax.random.PRNGKey(0)
    ks = jax.random.split(key, 9)
    scale = 0.1
    params = {
        "wq": scale * jax.random.normal(ks[0], (num_heads, in_features, mid_features), jnp.float32),
        "wk": scale * jax.random.normal(ks[1], (num_heads, in_features, mid_features), jnp.float32),
        "wv": scale * jax.random.normal(ks[2], (num_heads, in_features, mid_features), jnp.float32),
        "bq": scale * jax.random.normal(ks[3], (num_heads, mid_features), jnp.float32),
        "bk": scale * jax.random.normal(ks[4], (num_heads, mid_features), jnp.float32),
        "bv": scale * jax.random.normal(ks[5], (num_heads, mid_features), jnp.float32),
        "wp": scale * jax.random.normal(ks[6], (num_heads * mid_features, in_features), jnp.float32),
        "bp": scale * jax.random.normal(ks[7], (in_features,), jnp.float32),
    }
    x = jax.random.normal(ks[8], (B, S, in_features), jnp.float32)

    # Pack weights ONCE (not per forward call).
    packed = pack_mha_params(params)

    out = multi_head_attention(x, packed)        # default: grid=(B,) parallel
    out = jax.block_until_ready(out)

    # Also exercise the folded-batch path (single grid step, v5e/v6e mode).
    out_folded = jax.block_until_ready(
        multi_head_attention(x, packed, batch_block=B))

    ref = reference(x, params)
    assert out.shape == (B, S, in_features)
    assert jnp.allclose(out, ref, atol=1e-3, rtol=1e-3), "mismatch vs reference"
    assert jnp.allclose(out_folded, ref, atol=1e-3, rtol=1e-3), "mismatch (folded batch)"

    print("KERNEL_OK")
</pallas_src>

<mosaic_0001>
module attributes {stable_mosaic.version = 11 : i64} {
  func.func @kernel(%arg0: i32, %arg1: memref<8x32xf32, #tpu.memory_space<vmem>>, %arg2: memref<32x96xf32, #tpu.memory_space<vmem>>, %arg3: memref<1x96xf32, #tpu.memory_space<vmem>>, %arg4: memref<32x32xf32, #tpu.memory_space<vmem>>, %arg5: memref<1x32xf32, #tpu.memory_space<vmem>>, %arg6: memref<8x32xf32, #tpu.memory_space<vmem>>) attributes {dimension_semantics = [#tpu.dimension_semantics<parallel>], iteration_bounds = array<i64: 2>, scalar_prefetch = 0 : i64, scratch_operands = 0 : i64, tpu.core_type = #tpu.core_type<tc>, window_params = [{transform_indices = @transform_0, window_bounds = array<i64: 8, 32>}, {pipeline_mode = #tpu.pipeline_mode<synchronous>, transform_indices = @transform_1, window_bounds = array<i64: 32, 96>}, {pipeline_mode = #tpu.pipeline_mode<synchronous>, transform_indices = @transform_2, window_bounds = array<i64: 1, 96>}, {pipeline_mode = #tpu.pipeline_mode<synchronous>, transform_indices = @transform_3, window_bounds = array<i64: 32, 32>}, {pipeline_mode = #tpu.pipeline_mode<synchronous>, transform_indices = @transform_4, window_bounds = array<i64: 1, 32>}, {transform_indices = @transform_5, window_bounds = array<i64: 8, 32>}]} {
    %c0 = arith.constant 0 : index
    %c0_0 = arith.constant 0 : index
    %0 = vector.load %arg1[%c0, %c0_0] : memref<8x32xf32, #tpu.memory_space<vmem>>, vector<8x32xf32>
    %c0_1 = arith.constant 0 : index
    %c0_2 = arith.constant 0 : index
    %1 = vector.load %arg2[%c0_1, %c0_2] : memref<32x96xf32, #tpu.memory_space<vmem>>, vector<32x96xf32>
    %cst = arith.constant dense<0.000000e+00> : vector<8x96xf32>
    %2 = tpu.matmul %0, %1, %cst {dimension_numbers = #tpu.dot_dimension_numbers<[1], [0], [0], [1], [0, 0, 1, 1], [], []>} : vector<8x32xf32>, vector<32x96xf32>, vector<8x96xf32> -> vector<8x96xf32>
    %c0_3 = arith.constant 0 : index
    %c0_4 = arith.constant 0 : index
    %3 = vector.load %arg3[%c0_3, %c0_4] : memref<1x96xf32, #tpu.memory_space<vmem>>, vector<1x96xf32>
    %4 = vector.broadcast %3 : vector<1x96xf32> to vector<8x96xf32>
    %5 = arith.addf %2, %4 : vector<8x96xf32>
    %6 = vector.shape_cast %5 : vector<8x96xf32> to vector<1x8x96xf32>
    %c0_5 = arith.constant 0 : index
    %c0_6 = arith.constant 0 : index
    %7 = vector.load %arg4[%c0_5, %c0_6] : memref<32x32xf32, #tpu.memory_space<vmem>>, vector<32x32xf32>
    %cst_7 = arith.constant 0.000000e+00 : f32
    %8 = vector.broadcast %cst_7 : f32 to vector<8x32xf32>
    %9 = vector.extract_strided_slice %6 {offsets = [0, 0, 0], sizes = [1, 8, 8], strides = [1, 1, 1]} : vector<1x8x96xf32> to vector<1x8x8xf32>
    %10 = vector.extract_strided_slice %6 {offsets = [0, 0, 32], sizes = [1, 8, 8], strides = [1, 1, 1]} : vector<1x8x96xf32> to vector<1x8x8xf32>
    %11 = vector.extract_strided_slice %6 {offsets = [0, 0, 64], sizes = [1, 8, 8], strides = [1, 1, 1]} : vector<1x8x96xf32> to vector<1x8x8xf32>
    %cst_8 = arith.constant dense<0.000000e+00> : vector<1x8x8xf32>
    %12 = tpu.matmul %9, %10, %cst_8 {dimension_numbers = #tpu.dot_dimension_numbers<[2], [2], [1], [1], [0, 0, 0, 1, 1, 1], [0], [0]>} : vector<1x8x8xf32>, vector<1x8x8xf32>, vector<1x8x8xf32> -> vector<1x8x8xf32>
    %cst_9 = arith.constant dense<0xFF800000> : vector<1x8xf32>
    %13 = vector.multi_reduction <maximumf>, %12, %cst_9 [2] : vector<1x8x8xf32> to vector<1x8xf32>
    %14 = vector.shape_cast %13 : vector<1x8xf32> to vector<1x8x1xf32>
    %15 = vector.broadcast %14 : vector<1x8x1xf32> to vector<1x8x8xf32>
    %16 = arith.subf %12, %15 : vector<1x8x8xf32>
    %17 = math.exp %16 : vector<1x8x8xf32>
    %cst_10 = arith.constant dense<0.000000e+00> : vector<1x8xf32>
    %18 = vector.multi_reduction <add>, %17, %cst_10 [2] : vector<1x8x8xf32> to vector<1x8xf32>
    %19 = vector.shape_cast %18 : vector<1x8xf32> to vector<1x8x1xf32>
    %20 = vector.broadcast %19 : vector<1x8x1xf32> to vector<1x8x8xf32>
    %21 = arith.divf %17, %20 : vector<1x8x8xf32>
    %cst_11 = arith.constant dense<0.000000e+00> : vector<1x8x8xf32>
    %22 = tpu.matmul %21, %11, %cst_11 {dimension_numbers = #tpu.dot_dimension_numbers<[2], [1], [1], [2], [0, 0, 0, 1, 1, 2], [0], [0]>} : vector<1x8x8xf32>, vector<1x8x8xf32>, vector<1x8x8xf32> -> vector<1x8x8xf32>
    %23 = vector.shape_cast %22 : vector<1x8x8xf32> to vector<8x8xf32>
    %24 = vector.extract_strided_slice %7 {offsets = [0, 0], sizes = [8, 32], strides = [1, 1]} : vector<32x32xf32> to vector<8x32xf32>
    %cst_12 = arith.constant dense<0.000000e+00> : vector<8x32xf32>
    %25 = tpu.matmul %23, %24, %cst_12 {dimension_numbers = #tpu.dot_dimension_numbers<[1], [0], [0], [1], [0, 0, 1, 1], [], []>} : vector<8x8xf32>, vector<8x32xf32>, vector<8x32xf32> -> vector<8x32xf32>
    %26 = arith.addf %8, %25 : vector<8x32xf32>
    %27 = vector.extract_strided_slice %6 {offsets = [0, 0, 8], sizes = [1, 8, 8], strides = [1, 1, 1]} : vector<1x8x96xf32> to vector<1x8x8xf32>
    %28 = vector.extract_strided_slice %6 {offsets = [0, 0, 40], sizes = [1, 8, 8], strides = [1, 1, 1]} : vector<1x8x96xf32> to vector<1x8x8xf32>
    %29 = vector.extract_strided_slice %6 {offsets = [0, 0, 72], sizes = [1, 8, 8], strides = [1, 1, 1]} : vector<1x8x96xf32> to vector<1x8x8xf32>
    %cst_13 = arith.constant dense<0.000000e+00> : vector<1x8x8xf32>
    %30 = tpu.matmul %27, %28, %cst_13 {dimension_numbers = #tpu.dot_dimension_numbers<[2], [2], [1], [1], [0, 0, 0, 1, 1, 1], [0], [0]>} : vector<1x8x8xf32>, vector<1x8x8xf32>, vector<1x8x8xf32> -> vector<1x8x8xf32>
    %cst_14 = arith.constant dense<0xFF800000> : vector<1x8xf32>
    %31 = vector.multi_reduction <maximumf>, %30, %cst_14 [2] : vector<1x8x8xf32> to vector<1x8xf32>
    %32 = vector.shape_cast %31 : vector<1x8xf32> to vector<1x8x1xf32>
    %33 = vector.broadcast %32 : vector<1x8x1xf32> to vector<1x8x8xf32>
    %34 = arith.subf %30, %33 : vector<1x8x8xf32>
    %35 = math.exp %34 : vector<1x8x8xf32>
    %cst_15 = arith.constant dense<0.000000e+00> : vector<1x8xf32>
    %36 = vector.multi_reduction <add>, %35, %cst_15 [2] : vector<1x8x8xf32> to vector<1x8xf32>
    %37 = vector.shape_cast %36 : vector<1x8xf32> to vector<1x8x1xf32>
    %38 = vector.broadcast %37 : vector<1x8x1xf32> to vector<1x8x8xf32>
    %39 = arith.divf %35, %38 : vector<1x8x8xf32>
    %cst_16 = arith.constant dense<0.000000e+00> : vector<1x8x8xf32>
    %40 = tpu.matmul %39, %29, %cst_16 {dimension_numbers = #tpu.dot_dimension_numbers<[2], [1], [1], [2], [0, 0, 0, 1, 1, 2], [0], [0]>} : vector<1x8x8xf32>, vector<1x8x8xf32>, vector<1x8x8xf32> -> vector<1x8x8xf32>
    %41 = vector.shape_cast %40 : vector<1x8x8xf32> to vector<8x8xf32>
    %42 = vector.extract_strided_slice %7 {offsets = [8, 0], sizes = [8, 32], strides = [1, 1]} : vector<32x32xf32> to vector<8x32xf32>
    %cst_17 = arith.constant dense<0.000000e+00> : vector<8x32xf32>
    %43 = tpu.matmul %41, %42, %cst_17 {dimension_numbers = #tpu.dot_dimension_numbers<[1], [0], [0], [1], [0, 0, 1, 1], [], []>} : vector<8x8xf32>, vector<8x32xf32>, vector<8x32xf32> -> vector<8x32xf32>
    %44 = arith.addf %26, %43 : vector<8x32xf32>
    %45 = vector.extract_strided_slice %6 {offsets = [0, 0, 16], sizes = [1, 8, 8], strides = [1, 1, 1]} : vector<1x8x96xf32> to vector<1x8x8xf32>
    %46 = vector.extract_strided_slice %6 {offsets = [0, 0, 48], sizes = [1, 8, 8], strides = [1, 1, 1]} : vector<1x8x96xf32> to vector<1x8x8xf32>
    %47 = vector.extract_strided_slice %6 {offsets = [0, 0, 80], sizes = [1, 8, 8], strides = [1, 1, 1]} : vector<1x8x96xf32> to vector<1x8x8xf32>
    %cst_18 = arith.constant dense<0.000000e+00> : vector<1x8x8xf32>
    %48 = tpu.matmul %45, %46, %cst_18 {dimension_numbers = #tpu.dot_dimension_numbers<[2], [2], [1], [1], [0, 0, 0, 1, 1, 1], [0], [0]>} : vector<1x8x8xf32>, vector<1x8x8xf32>, vector<1x8x8xf32> -> vector<1x8x8xf32>
    %cst_19 = arith.constant dense<0xFF800000> : vector<1x8xf32>
    %49 = vector.multi_reduction <maximumf>, %48, %cst_19 [2] : vector<1x8x8xf32> to vector<1x8xf32>
    %50 = vector.shape_cast %49 : vector<1x8xf32> to vector<1x8x1xf32>
    %51 = vector.broadcast %50 : vector<1x8x1xf32> to vector<1x8x8xf32>
    %52 = arith.subf %48, %51 : vector<1x8x8xf32>
    %53 = math.exp %52 : vector<1x8x8xf32>
    %cst_20 = arith.constant dense<0.000000e+00> : vector<1x8xf32>
    %54 = vector.multi_reduction <add>, %53, %cst_20 [2] : vector<1x8x8xf32> to vector<1x8xf32>
    %55 = vector.shape_cast %54 : vector<1x8xf32> to vector<1x8x1xf32>
    %56 = vector.broadcast %55 : vector<1x8x1xf32> to vector<1x8x8xf32>
    %57 = arith.divf %53, %56 : vector<1x8x8xf32>
    %cst_21 = arith.constant dense<0.000000e+00> : vector<1x8x8xf32>
    %58 = tpu.matmul %57, %47, %cst_21 {dimension_numbers = #tpu.dot_dimension_numbers<[2], [1], [1], [2], [0, 0, 0, 1, 1, 2], [0], [0]>} : vector<1x8x8xf32>, vector<1x8x8xf32>, vector<1x8x8xf32> -> vector<1x8x8xf32>
    %59 = vector.shape_cast %58 : vector<1x8x8xf32> to vector<8x8xf32>
    %60 = vector.extract_strided_slice %7 {offsets = [16, 0], sizes = [8, 32], strides = [1, 1]} : vector<32x32xf32> to vector<8x32xf32>
    %cst_22 = arith.constant dense<0.000000e+00> : vector<8x32xf32>
    %61 = tpu.matmul %59, %60, %cst_22 {dimension_numbers = #tpu.dot_dimension_numbers<[1], [0], [0], [1], [0, 0, 1, 1], [], []>} : vector<8x8xf32>, vector<8x32xf32>, vector<8x32xf32> -> vector<8x32xf32>
    %62 = arith.addf %44, %61 : vector<8x32xf32>
    %63 = vector.extract_strided_slice %6 {offsets = [0, 0, 24], sizes = [1, 8, 8], strides = [1, 1, 1]} : vector<1x8x96xf32> to vector<1x8x8xf32>
    %64 = vector.extract_strided_slice %6 {offsets = [0, 0, 56], sizes = [1, 8, 8], strides = [1, 1, 1]} : vector<1x8x96xf32> to vector<1x8x8xf32>
    %65 = vector.extract_strided_slice %6 {offsets = [0, 0, 88], sizes = [1, 8, 8], strides = [1, 1, 1]} : vector<1x8x96xf32> to vector<1x8x8xf32>
    %cst_23 = arith.constant dense<0.000000e+00> : vector<1x8x8xf32>
    %66 = tpu.matmul %63, %64, %cst_23 {dimension_numbers = #tpu.dot_dimension_numbers<[2], [2], [1], [1], [0, 0, 0, 1, 1, 1], [0], [0]>} : vector<1x8x8xf32>, vector<1x8x8xf32>, vector<1x8x8xf32> -> vector<1x8x8xf32>
    %cst_24 = arith.constant dense<0xFF800000> : vector<1x8xf32>
    %67 = vector.multi_reduction <maximumf>, %66, %cst_24 [2] : vector<1x8x8xf32> to vector<1x8xf32>
    %68 = vector.shape_cast %67 : vector<1x8xf32> to vector<1x8x1xf32>
    %69 = vector.broadcast %68 : vector<1x8x1xf32> to vector<1x8x8xf32>
    %70 = arith.subf %66, %69 : vector<1x8x8xf32>
    %71 = math.exp %70 : vector<1x8x8xf32>
    %cst_25 = arith.constant dense<0.000000e+00> : vector<1x8xf32>
    %72 = vector.multi_reduction <add>, %71, %cst_25 [2] : vector<1x8x8xf32> to vector<1x8xf32>
    %73 = vector.shape_cast %72 : vector<1x8xf32> to vector<1x8x1xf32>
    %74 = vector.broadcast %73 : vector<1x8x1xf32> to vector<1x8x8xf32>
    %75 = arith.divf %71, %74 : vector<1x8x8xf32>
    %cst_26 = arith.constant dense<0.000000e+00> : vector<1x8x8xf32>
    %76 = tpu.matmul %75, %65, %cst_26 {dimension_numbers = #tpu.dot_dimension_numbers<[2], [1], [1], [2], [0, 0, 0, 1, 1, 2], [0], [0]>} : vector<1x8x8xf32>, vector<1x8x8xf32>, vector<1x8x8xf32> -> vector<1x8x8xf32>
    %77 = vector.shape_cast %76 : vector<1x8x8xf32> to vector<8x8xf32>
    %78 = vector.extract_strided_slice %7 {offsets = [24, 0], sizes = [8, 32], strides = [1, 1]} : vector<32x32xf32> to vector<8x32xf32>
    %cst_27 = arith.constant dense<0.000000e+00> : vector<8x32xf32>
    %79 = tpu.matmul %77, %78, %cst_27 {dimension_numbers = #tpu.dot_dimension_numbers<[1], [0], [0], [1], [0, 0, 1, 1], [], []>} : vector<8x8xf32>, vector<8x32xf32>, vector<8x32xf32> -> vector<8x32xf32>
    %80 = arith.addf %62, %79 : vector<8x32xf32>
    %c0_28 = arith.constant 0 : index
    %c0_29 = arith.constant 0 : index
    %81 = vector.load %arg5[%c0_28, %c0_29] : memref<1x32xf32, #tpu.memory_space<vmem>>, vector<1x32xf32>
    %82 = vector.broadcast %81 : vector<1x32xf32> to vector<8x32xf32>
    %83 = arith.addf %80, %82 : vector<8x32xf32>
    %c0_30 = arith.constant 0 : index
    %c0_31 = arith.constant 0 : index
    %84 = vector.load %arg6[%c0_30, %c0_31] : memref<8x32xf32, #tpu.memory_space<vmem>>, vector<8x32xf32>
    tpu.vector_store %arg6[%c0_30, %c0_31], %83 {strides = array<i32>} : memref<8x32xf32, #tpu.memory_space<vmem>>, vector<8x32xf32>,
    return
  }
  func.func @transform_0(%arg0: i32) -> (i32, i32) {
    %c0_i32 = arith.constant 0 : i32
    %c0_i32_0 = arith.constant 0 : i32
    return %arg0, %c0_i32 : i32, i32
  }
  func.func @transform_1(%arg0: i32) -> (i32, i32) {
    %c0_i32 = arith.constant 0 : i32
    %c0_i32_0 = arith.constant 0 : i32
    %c0_i32_1 = arith.constant 0 : i32
    return %c0_i32, %c0_i32_0 : i32, i32
  }
  func.func @transform_2(%arg0: i32) -> (i32, i32) {
    %c0_i32 = arith.constant 0 : i32
    %c0_i32_0 = arith.constant 0 : i32
    %c0_i32_1 = arith.constant 0 : i32
    return %c0_i32, %c0_i32_0 : i32, i32
  }
  func.func @transform_3(%arg0: i32) -> (i32, i32) {
    %c0_i32 = arith.constant 0 : i32
    %c0_i32_0 = arith.constant 0 : i32
    %c0_i32_1 = arith.constant 0 : i32
    return %c0_i32, %c0_i32_0 : i32, i32
  }
  func.func @transform_4(%arg0: i32) -> (i32, i32) {
    %c0_i32 = arith.constant 0 : i32
    %c0_i32_0 = arith.constant 0 : i32
    %c0_i32_1 = arith.constant 0 : i32
    return %c0_i32, %c0_i32_0 : i32, i32
  }
  func.func @transform_5(%arg0: i32) -> (i32, i32) {
    %c0_i32 = arith.constant 0 : i32
    %c0_i32_0 = arith.constant 0 : i32
    return %arg0, %c0_i32 : i32, i32
  }
}

</mosaic_0001>

<llo_original>
// kernel: tpu_custom_call.1
$region0: #{tpu_custom_call.1}
  #allocation0 [shape = 'u32[]', space=smem, size = 0x4, offset = 0x4, fixed_abs, tag = 'smem constant byte address 0x4 - core index']
  #allocation1 [shape = 'u32[72,128]{1,0:T(1,128)}', space=vmem, size = 0x9000, scoped, tag = 'internal scratch']
  %s0 = inlined_call_operand.hbm [shape: f32[16,32], index: 0, kind: input, shape index: {}]
  %s1 = inlined_call_operand.hbm [shape: f32[32,96], index: 1, kind: input, shape index: {}]
  %s2 = inlined_call_operand.vmem [shape: f32[1,96], index: 2, kind: input, shape index: {}]
  %s3 = inlined_call_operand.hbm [shape: f32[32,32], index: 3, kind: input, shape index: {}]
  %s4 = inlined_call_operand.vmem [shape: f32[1,32], index: 4, kind: input, shape index: {}]
  %s5 = inlined_call_operand.hbm [shape: f32[16,32], index: 5, kind: output, shape index: {}]
  %s6 = sld [smem:[#allocation0]]
  $region65: #{tpu_custom_call.1} parent=0
    _
  %s8 = ssub.s32 1, %s6
  %s9 = scalar_select 0, %s8, %s6
  $region1: #{tpu_custom_call.1} parent=0
    #allocation2 [shape = 'u8[8192]{0}', space=vmem, size = 0x2000, scoped, tag = 'input window, operand 0']
    #allocation3 [shape = 's32[2]{0}', space=sflag, size = 0x8, scoped, tag = 'scoped memory for tpu_custom_call.1']
    #allocation4 [shape = 's32[2]{0}', space=sflag, size = 0x8, scoped, tag = 'scoped memory for tpu_custom_call.1']
    #allocation5 [shape = 'u8[16384]{0}', space=vmem, size = 0x4000, scoped, tag = 'input window, operand 1, single buffered']
    #allocation6 [shape = 's32[1]{0}', space=sflag, size = 0x4, scoped, tag = 'scoped memory for tpu_custom_call.1']
    #allocation7 [shape = 'u8[16384]{0}', space=vmem, size = 0x4000, scoped, tag = 'input window, operand 3, single buffered']
    #allocation8 [shape = 'u8[8192]{0}', space=vmem, size = 0x2000, scoped, tag = 'output window, operand 0']
    %10 = vsyncpa [#allocation3], 0
    %s11 = scalar_lea.sflag [#allocation3], 1
    %12 = vsyncpa %s11, 0
    %13 = vsyncpa [#allocation6], 0
    %14 = vsyncpa [#allocation4], 0
    %s15 = scalar_lea.sflag [#allocation4], 1
    %16 = vsyncpa %s15, 0
    loop: start=0, step=1, limit=4
    $region2: #{tpu_custom_call.1} parent=1 // loop_pre_header
      _
    $region3: #{tpu_custom_call.1} parent=1 // loop_header
      %s18 = sphi 0, %s22
      %p19 = scmp.ge.s32.totalorder %s18, 4
      %s28 = sphi 0, %s30
      %s31 = sphi 0, %s28
      %s32 = sphi 0, %s31
      %s48 = sphi 0, %s32
      %s52 = sphi 0, %s52
      %s54 = sphi 0, %s52
      %s55 = sphi 0, %s54
      %s69 = sphi 0, %s55
      %s73 = sphi 0, %s73
      %s75 = sphi 0, %s73
      %s76 = sphi 0, %s75
      %s90 = sphi 0, %s76
      %s94 = sphi 0, %s94
      %s96 = sphi 0, %s94
      %s97 = sphi 0, %s96
      %s111 = sphi 0, %s97
      %s115 = sphi 0, %s115
      %s117 = sphi 0, %s115
      %s118 = sphi 0, %s117
      %s132 = sphi 0, %s118
      %s138 = sphi 0, %s140
      %s141 = sphi 0, %s138
      %s142 = sphi 0, %s141
      %s158 = sphi 0, %s142
    $region4: #{tpu_custom_call.1} parent=1 // loop_header_branch
      %21 = sbr.rel (%p19) target = $region8
    $region5: #{tpu_custom_call.1} parent=1 // loop_body
      %s23 = ssub.s32 %s18, 1
      %s24 = ssub.s32 %s18, 2
      %s25 = sadd.s32 %s18, 1
      %s26 = ssub.s32 %s18, %s25
      %p27 = scmp.eq.s32.totalorder %s26, 0
      %s29 = sadd.s32 %s28, 1
      %s30 = scalar_select %p27, %s28, %s29
      %p33 = pneg %p27
      %p34 = scmp.eq.s32.totalorder %s18, 1
      %p35 = por %p33, %p34
      %p36 = scmp.ne.s32.totalorder %s28, %s31
      %p37 = scmp.eq.s32.totalorder %s18, 0
      %p38 = por %p36, %p37
      %p39 = scmp.ne.s32.totalorder %s28, %s31
      %p40 = scmp.eq.s32.totalorder %s23, 1
      %p41 = por %p39, %p40
      %p42 = scmp.ne.s32.totalorder %s31, %s32
      %p43 = scmp.eq.s32.totalorder %s23, 0
      %p44 = por %p42, %p43
      %p45 = scmp.ne.s32.totalorder %s31, %s32
      %p46 = scmp.eq.s32.totalorder %s24, 1
      %p47 = por %p45, %p46
      %p49 = scmp.ne.s32.totalorder %s32, %s48
      %p50 = scmp.eq.s32.totalorder %s24, 0
      %p51 = por %p49, %p50
      %s53 = sadd.s32 %s52, 1
      %p56 = scmp.eq.s32.totalorder %s18, 1
      %p57 = scmp.ne.s32.totalorder %s52, %s54
      %p58 = scmp.eq.s32.totalorder %s18, 0
      %p59 = por %p57, %p58
      %p60 = scmp.ne.s32.totalorder %s52, %s54
      %p61 = scmp.eq.s32.totalorder %s23, 1
      %p62 = por %p60, %p61
      %p63 = scmp.ne.s32.totalorder %s54, %s55
      %p64 = scmp.eq.s32.totalorder %s23, 0
      %p65 = por %p63, %p64
      %p66 = scmp.ne.s32.totalorder %s54, %s55
      %p67 = scmp.eq.s32.totalorder %s24, 1
      %p68 = por %p66, %p67
      %p70 = scmp.ne.s32.totalorder %s55, %s69
      %p71 = scmp.eq.s32.totalorder %s24, 0
      %p72 = por %p70, %p71
      %s74 = sadd.s32 %s73, 1
      %p77 = scmp.eq.s32.totalorder %s18, 1
      %p78 = scmp.ne.s32.totalorder %s73, %s75
      %p79 = scmp.eq.s32.totalorder %s18, 0
      %p80 = por %p78, %p79
      %p81 = scmp.ne.s32.totalorder %s73, %s75
      %p82 = scmp.eq.s32.totalorder %s23, 1
      %p83 = por %p81, %p82
      %p84 = scmp.ne.s32.totalorder %s75, %s76
      %p85 = scmp.eq.s32.totalorder %s23, 0
      %p86 = por %p84, %p85
      %p87 = scmp.ne.s32.totalorder %s75, %s76
      %p88 = scmp.eq.s32.totalorder %s24, 1
      %p89 = por %p87, %p88
      %p91 = scmp.ne.s32.totalorder %s76, %s90
      %p92 = scmp.eq.s32.totalorder %s24, 0
      %p93 = por %p91, %p92
      %s95 = sadd.s32 %s94, 1
      %p98 = scmp.eq.s32.totalorder %s18, 1
      %p99 = scmp.ne.s32.totalorder %s94, %s96
      %p100 = scmp.eq.s32.totalorder %s18, 0
      %p101 = por %p99, %p100
      %p102 = scmp.ne.s32.totalorder %s94, %s96
      %p103 = scmp.eq.s32.totalorder %s23, 1
      %p104 = por %p102, %p103
      %p105 = scmp.ne.s32.totalorder %s96, %s97
      %p106 = scmp.eq.s32.totalorder %s23, 0
      %p107 = por %p105, %p106
      %p108 = scmp.ne.s32.totalorder %s96, %s97
      %p109 = scmp.eq.s32.totalorder %s24, 1
      %p110 = por %p108, %p109
      %p112 = scmp.ne.s32.totalorder %s97, %s111
      %p113 = scmp.eq.s32.totalorder %s24, 0
      %p114 = por %p112, %p113
      %s116 = sadd.s32 %s115, 1
      %p119 = scmp.eq.s32.totalorder %s18, 1
      %p120 = scmp.ne.s32.totalorder %s115, %s117
      %p121 = scmp.eq.s32.totalorder %s18, 0
      %p122 = por %p120, %p121
      %p123 = scmp.ne.s32.totalorder %s115, %s117
      %p124 = scmp.eq.s32.totalorder %s23, 1
      %p125 = por %p123, %p124
      %p126 = scmp.ne.s32.totalorder %s117, %s118
      %p127 = scmp.eq.s32.totalorder %s23, 0
      %p128 = por %p126, %p127
      %p129 = scmp.ne.s32.totalorder %s117, %s118
      %p130 = scmp.eq.s32.totalorder %s24, 1
      %p131 = por %p129, %p130
      %p133 = scmp.ne.s32.totalorder %s118, %s132
      %p134 = scmp.eq.s32.totalorder %s24, 0
      %p135 = por %p133, %p134
      %s136 = ssub.s32 %s18, %s25
      %p137 = scmp.eq.s32.totalorder %s136, 0
      %s139 = sadd.s32 %s138, 1
      %s140 = scalar_select %p137, %s138, %s139
      %p143 = pneg %p137
      %p144 = scmp.eq.s32.totalorder %s18, 1
      %p145 = por %p143, %p144
      %p146 = scmp.ne.s32.totalorder %s138, %s141
      %p147 = scmp.eq.s32.totalorder %s18, 0
      %p148 = por %p146, %p147
      %p149 = scmp.ne.s32.totalorder %s138, %s141
      %p150 = scmp.eq.s32.totalorder %s23, 1
      %p151 = por %p149, %p150
      %p152 = scmp.ne.s32.totalorder %s141, %s142
      %p153 = scmp.eq.s32.totalorder %s23, 0
      %p154 = por %p152, %p153
      %p155 = scmp.ne.s32.totalorder %s141, %s142
      %p156 = scmp.eq.s32.totalorder %s24, 1
      %p157 = por %p155, %p156
      %p159 = scmp.ne.s32.totalorder %s142, %s158
      %p160 = scmp.eq.s32.totalorder %s24, 0
      %p161 = por %p159, %p160
      %p162 = scmp.le.s32.totalorder 1, %s18
      %p163 = scmp.lt.s32.totalorder %s18, 3
      %p164 = pnand %p162, %p163
      %p165 = pneg %p164
      // Predicated region
      $region9: #{tpu_custom_call.1} parent=5 // pred_check
        _
      $region10: #{tpu_custom_call.1} parent=5 // pred_check_branch
        %167 = sbr.rel (%p164) target = $region12
      $region11: #{tpu_custom_call.1} parent=5 // pred_region
        %s168 = ssub.s32 %s18, 1
        // Predicated region
        $region13: #{tpu_custom_call.1} parent=11 // pred_check
          %p169 = pneg %p65
        $region14: #{tpu_custom_call.1} parent=11 // pred_check_branch
          %171 = sbr.rel (%p169) target = $region16
        $region15: #{tpu_custom_call.1} parent=11 // pred_region
          %173 = vsyncadd [#allocation6], 0
          %s174 = sshll.u32 %s1, 4
          %s175 = int_to_ptr.hbm [resolvable:$true] %s174
          %s176 = sshll.u32 [#allocation5], 4
          %s177 = int_to_ptr.vmem [resolvable:$true] %s176
          %182 = dma.hbm_to_vmem [thread:$0]  %s175, 512, %s177, [#allocation6], 128, 128, 8
        $region16: #{tpu_custom_call.1} parent=11 // pred_fallthru
          _
        // Predicated region
        $region17: #{tpu_custom_call.1} parent=11 // pred_check
          %p183 = pneg %p86
        $region18: #{tpu_custom_call.1} parent=11 // pred_check_branch
          %185 = sbr.rel (%p183) target = $region20
        $region19: #{tpu_custom_call.1} parent=11 // pred_region
          _
        $region20: #{tpu_custom_call.1} parent=11 // pred_fallthru
          _
        // Predicated region
        $region21: #{tpu_custom_call.1} parent=11 // pred_check
          %p186 = pneg %p107
        $region22: #{tpu_custom_call.1} parent=11 // pred_check_branch
          %188 = sbr.rel (%p186) target = $region24
        $region23: #{tpu_custom_call.1} parent=11 // pred_region
          %190 = vsyncadd [#allocation6], 0
          %s191 = sshll.u32 %s3, 4
          %s192 = int_to_ptr.hbm [resolvable:$true] %s191
          %s193 = sshll.u32 [#allocation7], 4
          %s194 = int_to_ptr.vmem [resolvable:$true] %s193
          %199 = dma.hbm_to_vmem [thread:$0]  %s192, 512, %s194, [#allocation6], 128, 128, 8
        $region24: #{tpu_custom_call.1} parent=11 // pred_fallthru
          _
        // Predicated region
        $region25: #{tpu_custom_call.1} parent=11 // pred_check
          %p200 = pneg %p128
        $region26: #{tpu_custom_call.1} parent=11 // pred_check_branch
          %202 = sbr.rel (%p200) target = $region28
        $region27: #{tpu_custom_call.1} parent=11 // pred_region
          _
        $region28: #{tpu_custom_call.1} parent=11 // pred_fallthru
          _
      $region12: #{tpu_custom_call.1} parent=5 // pred_fallthru
        _
      %p203 = scmp.lt.s32.totalorder %s18, 2
      // Predicated region
      $region29: #{tpu_custom_call.1} parent=5 // pred_check
        %p204 = pneg %p203
      $region30: #{tpu_custom_call.1} parent=5 // pred_check_branch
        %206 = sbr.rel (%p204) target = $region32
      $region31: #{tpu_custom_call.1} parent=5 // pred_region
        // Predicated region
        $region33: #{tpu_custom_call.1} parent=31 // pred_check
          %p207 = pneg %p38
        $region34: #{tpu_custom_call.1} parent=31 // pred_check_branch
          %209 = sbr.rel (%p207) target = $region36
        $region35: #{tpu_custom_call.1} parent=31 // pred_region
          %s210 = sand.u32 %s28, 1
          %s211 = scalar_lea.sflag [#allocation3], %s210
          %s212 = sand.u32 %s28, 1
          %s213 = smul.addr %s212, 8
          %s214 = scalar_lea.vmem [#allocation2], %s213
          %216 = vsyncadd %s211, 0
          %s217 = smul.addr %s18, 8
          %s218 = scalar_lea.hbm %s0, %s217
          %s220 = sshll.u32 %s218, 4
          %s221 = int_to_ptr.hbm [resolvable:$true] %s220
          %s222 = sshll.u32 %s214, 4
          %s223 = int_to_ptr.vmem [resolvable:$true] %s222
          %225 = dma.hbm_to_vmem [thread:$0]  %s221, 128, %s223, %s211
        $region36: #{tpu_custom_call.1} parent=31 // pred_fallthru
          _
      $region32: #{tpu_custom_call.1} parent=5 // pred_fallthru
        _
      %p226 = scmp.le.s32.totalorder 1, %s18
      %p227 = scmp.lt.s32.totalorder %s18, 3
      %p228 = pnand %p226, %p227
      %p229 = pneg %p228
      // Predicated region
      $region37: #{tpu_custom_call.1} parent=5 // pred_check
        _
      $region38: #{tpu_custom_call.1} parent=5 // pred_check_branch
        %231 = sbr.rel (%p228) target = $region40
      $region39: #{tpu_custom_call.1} parent=5 // pred_region
        %s232 = ssub.s32 %s18, 1
        %s233 = sand.u32 %s31, 1
        %s234 = scalar_lea.sflag [#allocation3], %s233
        %s235 = sand.u32 %s31, 1
        %s236 = smul.addr %s235, 8
        %s237 = scalar_lea.vmem [#allocation2], %s236
        // Predicated region
        $region41: #{tpu_custom_call.1} parent=39 // pred_check
          %p238 = pneg %p44
        $region42: #{tpu_custom_call.1} parent=39 // pred_check_branch
          %240 = sbr.rel (%p238) target = $region44
        $region43: #{tpu_custom_call.1} parent=39 // pred_region
          %242 = dma.done %s234, 128
        $region44: #{tpu_custom_call.1} parent=39 // pred_fallthru
          _
        // Predicated region
        $region45: #{tpu_custom_call.1} parent=39 // pred_check
          %p243 = pneg %p65
        $region46: #{tpu_custom_call.1} parent=39 // pred_check_branch
          %245 = sbr.rel (%p243) target = $region48
        $region47: #{tpu_custom_call.1} parent=39 // pred_region
          %247 = dma.done [#allocation6], 512
        $region48: #{tpu_custom_call.1} parent=39 // pred_fallthru
          _
        // Predicated region
        $region49: #{tpu_custom_call.1} parent=39 // pred_check
          %p248 = pneg %p107
        $region50: #{tpu_custom_call.1} parent=39 // pred_check_branch
          %250 = sbr.rel (%p248) target = $region52
        $region51: #{tpu_custom_call.1} parent=39 // pred_region
          %252 = dma.done [#allocation6], 512
        $region52: #{tpu_custom_call.1} parent=39 // pred_fallthru
          _
        %s253 = sand.u32 %s31, 1
        %s254 = scalar_lea.sflag [#allocation3], %s253
        %s255 = sand.u32 %s31, 1
        %s256 = smul.addr %s255, 8
        %s257 = scalar_lea.vmem [#allocation2], %s256
        %p258 = pneg %p44
        %p259 = pneg %p41
        %p260 = pneg %p65
        %p261 = pneg %p62
        %p262 = pneg %p86
        %p263 = pneg %p83
        %p264 = pneg %p107
        %p265 = pneg %p104
        %p266 = pneg %p128
        %p267 = pneg %p125
        %p268 = pneg %p154
        %p269 = pneg %p151
        %s270 = sand.u32 %s141, 1
        %s271 = scalar_lea.sflag [#allocation4], %s270
        %s272 = sand.u32 %s141, 1
        %s273 = smul.addr %s272, 8
        %s274 = scalar_lea.vmem [#allocation8], %s273
        %v275 = vld [vmem:[%s237] sm:$0xff]
        %v276 = vld [vmem:[#allocation5] sm:$0xff]
        %v277 = vld [vmem:[#allocation5 + $0x8] sm:$0xff]
        %v278 = vld [vmem:[#allocation5 + $0x10] sm:$0xff]
        %v279 = vld [vmem:[#allocation5 + $0x18] sm:$0xff]
        %v280 = vld [vmem:[%s2] sm:$0x1]
        %v282 = vperm.slane %v280, 0
        %vm284 = vcmask 261120
        %v286 = vsel %vm284, %v275, 0
        %288 = vmatpush.msra.mxu0 0.0
        %289 = vmatpush.msra.mxu0 0.0
        %290 = vmatpush.msra.mxu0 0.0
        %291 = vmatpush.msra.mxu0 0.0
        %292 = vmatpush.msra.mxu0 0.0
        %293 = vmatpush.msra.mxu0 0.0
        %294 = vmatpush.msra.mxu0 0.0
        %295 = vmatpush.msra.mxu0 0.0
        %296 = vmatpush.msra.mxu0 0.0
        %297 = vmatpush.msra.mxu0 0.0
        %298 = vmatpush.msra.mxu0 0.0
        %299 = vmatpush.msra.mxu0 0.0
        %300 = vmatpush.msra.mxu0 %v279
        %301 = vmatpush.msra.mxu0 %v278
        %302 = vmatpush.msra.mxu0 %v277
        %303 = vmatpush.msra.mxu0 %v276
        %304 = vmatmul.f32.gmra.mxu0 %v286
        %v305 = vpop.f32.mrf.mxu0
        %v306 = vadd.f32 %v282, %v305
        %307 = vdwg.mxu0
        %v308 = vld [vmem:[#allocation7] sm:$0xff]
        %v309 = vld [vmem:[#allocation7 + $0x8] sm:$0xff]
        %v310 = vld [vmem:[#allocation7 + $0x10] sm:$0xff]
        %v311 = vld [vmem:[#allocation7 + $0x18] sm:$0xff]
        %313 = vrot.lane.b32.xlu0 %v306, 96
        %v314 = vpop.permute.xlu0 %313
        %vm315 = vcmask 64512
        %v316 = vsel %vm315, %v306, 0
        %v318 = vsel %vm315, %v314, 0
        %320 = vmatpush.xpose.msra.mxu0 0.0
        %321 = vmatpush.xpose.msra.mxu0 0.0
        %322 = vmatpush.xpose.msra.mxu0 0.0
        %323 = vmatpush.xpose.msra.mxu0 0.0
        %324 = vmatpush.xpose.msra.mxu0 0.0
        %325 = vmatpush.xpose.msra.mxu0 0.0
        %326 = vmatpush.xpose.msra.mxu0 0.0
        %327 = vmatpush.xpose.msra.mxu0 0.0
        %328 = vmatpush.xpose.msra.mxu0 0.0
        %329 = vmatpush.xpose.msra.mxu0 0.0
        %330 = vmatpush.xpose.msra.mxu0 0.0
        %331 = vmatpush.xpose.msra.mxu0 0.0
        %332 = vmatpush.xpose.msra.mxu0 0.0
        %333 = vmatpush.xpose.msra.mxu0 0.0
        %334 = vmatpush.xpose.msra.mxu0 0.0
        %335 = vmatpush.xpose.msra.mxu0 %v318
        %336 = vmatmul.f32.gmra.mxu0 %v316
        %v337 = vpop.f32.mrf.mxu0
        %v338 = vadd.f32 0.0, %v337
        %339 = vdwg.mxu0
        %v340 = vsel %vm315, %v338, -inf
        %341 = vmax.xlane.f32.xlu0 %v340
        %v342 = vpop.xlane.xlu0 %341
        %v343 = vsub.f32 %v338, %v342
        %v344 = vmul.f32 %v343, 1.442695
        %v345 = vpow.pop %v344
        %v346 = vsel %vm315, %v345, 0.0
        %347 = vadd.xlane.f32.xlu0 %v346
        %v348 = vpop.xlane.xlu0 %347
        %v349 = vrcp.pop %v348
        %v350 = vmul.f32 %v348, %v349
        %v351 = vsub.f32 1.0, %v350
        %v352 = vmul.f32 %v349, %v351
        %v353 = vadd.f32 %v349, %v352
        %vm354 = vweird.f32 %v348
        %vm355 = vweird.f32 %v349
        %vm356 = vmor %vm354, %vm355
        %v357 = vsel %vm356, %v349, %v353
        %v358 = vand.u32 2147483647, %v348
        %vm359 = vcmp.eq.f32.partialorder %v358, 8.507059e+37
        %v360 = vand.u32 %v348, 2147483648
        %v361 = vor.u32 1.1754944e-38, %v360
        %v362 = vsel %vm359, %v361, %v357
        %v363 = vmul.f32 %v345, %v362
        %364 = vrot.lane.b32.xlu0 %v306, 64
        %v365 = vpop.permute.xlu0 %364
        %v368 = vsel %vm315, %v363, 0
        %370 = vmatpush.msra.mxu0 0.0
        %371 = vmatpush.msra.mxu0 0.0
        %372 = vmatpush.msra.mxu0 0.0
        %373 = vmatpush.msra.mxu0 0.0
        %374 = vmatpush.msra.mxu0 0.0
        %375 = vmatpush.msra.mxu0 0.0
        %376 = vmatpush.msra.mxu0 0.0
        %377 = vmatpush.msra.mxu0 0.0
        %378 = vmatpush.msra.mxu0 0.0
        %379 = vmatpush.msra.mxu0 0.0
        %380 = vmatpush.msra.mxu0 0.0
        %381 = vmatpush.msra.mxu0 0.0
        %382 = vmatpush.msra.mxu0 0.0
        %383 = vmatpush.msra.mxu0 0.0
        %384 = vmatpush.msra.mxu0 0.0
        %385 = vmatpush.msra.mxu0 %v365
        %386 = vmatmul.f32.gmra.mxu0 %v368
        %v387 = vpop.f32.mrf.mxu0
        %v388 = vadd.f32 0.0, %v387
        %389 = vdwg.mxu0
        %390 = vrot.lane.b32.xlu0 %v306, 120
        %v391 = vpop.permute.xlu0 %390
        %392 = vrot.lane.b32.xlu0 %v306, 88
        %v393 = vpop.permute.xlu0 %392
        %v394 = vsel %vm315, %v391, 0
        %v396 = vsel %vm315, %v393, 0
        %398 = vmatpush.xpose.msra.mxu0 0.0
        %399 = vmatpush.xpose.msra.mxu0 0.0
        %400 = vmatpush.xpose.msra.mxu0 0.0
        %401 = vmatpush.xpose.msra.mxu0 0.0
        %402 = vmatpush.xpose.msra.mxu0 0.0
        %403 = vmatpush.xpose.msra.mxu0 0.0
        %404 = vmatpush.xpose.msra.mxu0 0.0
        %405 = vmatpush.xpose.msra.mxu0 0.0
        %406 = vmatpush.xpose.msra.mxu0 0.0
        %407 = vmatpush.xpose.msra.mxu0 0.0
        %408 = vmatpush.xpose.msra.mxu0 0.0
        %409 = vmatpush.xpose.msra.mxu0 0.0
        %410 = vmatpush.xpose.msra.mxu0 0.0
        %411 = vmatpush.xpose.msra.mxu0 0.0
        %412 = vmatpush.xpose.msra.mxu0 0.0
        %413 = vmatpush.xpose.msra.mxu0 %v396
        %414 = vmatmul.f32.gmra.mxu0 %v394
        %v415 = vpop.f32.mrf.mxu0
        %v416 = vadd.f32 0.0, %v415
        %417 = vdwg.mxu0
        %v418 = vsel %vm315, %v416, -inf
        %419 = vmax.xlane.f32.xlu0 %v418
        %v420 = vpop.xlane.xlu0 %419
        %v421 = vsub.f32 %v416, %v420
        %v422 = vmul.f32 %v421, 1.442695
        %v423 = vpow.pop %v422
        %v424 = vsel %vm315, %v423, 0.0
        %425 = vadd.xlane.f32.xlu0 %v424
        %v426 = vpop.xlane.xlu0 %425
        %v427 = vrcp.pop %v426
        %v428 = vmul.f32 %v426, %v427
        %v429 = vsub.f32 1.0, %v428
        %v430 = vmul.f32 %v427, %v429
        %v431 = vadd.f32 %v427, %v430
        %vm432 = vweird.f32 %v426
        %vm433 = vweird.f32 %v427
        %vm434 = vmor %vm432, %vm433
        %v435 = vsel %vm434, %v427, %v431
        %v436 = vand.u32 2147483647, %v426
        %vm437 = vcmp.eq.f32.partialorder %v436, 8.507059e+37
        %v438 = vand.u32 %v426, 2147483648
        %v439 = vor.u32 1.1754944e-38, %v438
        %v440 = vsel %vm437, %v439, %v435
        %v441 = vmul.f32 %v423, %v440
        %442 = vrot.lane.b32.xlu0 %v306, 56
        %v443 = vpop.permute.xlu0 %442
        %v446 = vsel %vm315, %v441, 0
        %448 = vmatpush.msra.mxu0 0.0
        %449 = vmatpush.msra.mxu0 0.0
        %450 = vmatpush.msra.mxu0 0.0
        %451 = vmatpush.msra.mxu0 0.0
        %452 = vmatpush.msra.mxu0 0.0
        %453 = vmatpush.msra.mxu0 0.0
        %454 = vmatpush.msra.mxu0 0.0
        %455 = vmatpush.msra.mxu0 0.0
        %456 = vmatpush.msra.mxu0 0.0
        %457 = vmatpush.msra.mxu0 0.0
        %458 = vmatpush.msra.mxu0 0.0
        %459 = vmatpush.msra.mxu0 0.0
        %460 = vmatpush.msra.mxu0 0.0
        %461 = vmatpush.msra.mxu0 0.0
        %462 = vmatpush.msra.mxu0 0.0
        %463 = vmatpush.msra.mxu0 %v443
        %464 = vmatmul.f32.gmra.mxu0 %v446
        %v465 = vpop.f32.mrf.mxu0
        %v466 = vadd.f32 0.0, %v465
        %467 = vdwg.mxu0
        %v469 = vsel %vm315, %v466, 0
        %471 = vmatpush.msra.mxu0 0.0
        %472 = vmatpush.msra.mxu0 0.0
        %473 = vmatpush.msra.mxu0 0.0
        %474 = vmatpush.msra.mxu0 0.0
        %475 = vmatpush.msra.mxu0 0.0
        %476 = vmatpush.msra.mxu0 0.0
        %477 = vmatpush.msra.mxu0 0.0
        %478 = vmatpush.msra.mxu0 0.0
        %479 = vmatpush.msra.mxu0 0.0
        %480 = vmatpush.msra.mxu0 0.0
        %481 = vmatpush.msra.mxu0 0.0
        %482 = vmatpush.msra.mxu0 0.0
        %483 = vmatpush.msra.mxu0 0.0
        %484 = vmatpush.msra.mxu0 0.0
        %485 = vmatpush.msra.mxu0 0.0
        %486 = vmatpush.msra.mxu0 %v309
        %487 = vmatmul.f32.gmra.mxu0 %v469
        %v488 = vpop.f32.mrf.mxu0
        %v489 = vadd.f32 0.0, %v488
        %490 = vdwg.mxu0
        %v492 = vsel %vm315, %v388, 0
        %494 = vmatpush.msra.mxu0 0.0
        %495 = vmatpush.msra.mxu0 0.0
        %496 = vmatpush.msra.mxu0 0.0
        %497 = vmatpush.msra.mxu0 0.0
        %498 = vmatpush.msra.mxu0 0.0
        %499 = vmatpush.msra.mxu0 0.0
        %500 = vmatpush.msra.mxu0 0.0
        %501 = vmatpush.msra.mxu0 0.0
        %502 = vmatpush.msra.mxu0 0.0
        %503 = vmatpush.msra.mxu0 0.0
        %504 = vmatpush.msra.mxu0 0.0
        %505 = vmatpush.msra.mxu0 0.0
        %506 = vmatpush.msra.mxu0 0.0
        %507 = vmatpush.msra.mxu0 0.0
        %508 = vmatpush.msra.mxu0 0.0
        %509 = vmatpush.msra.mxu0 %v308
        %510 = vmatmul.f32.gmra.mxu0 %v492
        %v511 = vpop.f32.mrf.mxu0
        %v512 = vadd.f32 %v489, %v511
        %513 = vdwg.mxu0
        %514 = vrot.lane.b32.xlu0 %v306, 112
        %v515 = vpop.permute.xlu0 %514
        %516 = vrot.lane.b32.xlu0 %v306, 80
        %v517 = vpop.permute.xlu0 %516
        %v518 = vsel %vm315, %v515, 0
        %v520 = vsel %vm315, %v517, 0
        %522 = vmatpush.xpose.msra.mxu0 0.0
        %523 = vmatpush.xpose.msra.mxu0 0.0
        %524 = vmatpush.xpose.msra.mxu0 0.0
        %525 = vmatpush.xpose.msra.mxu0 0.0
        %526 = vmatpush.xpose.msra.mxu0 0.0
        %527 = vmatpush.xpose.msra.mxu0 0.0
        %528 = vmatpush.xpose.msra.mxu0 0.0
        %529 = vmatpush.xpose.msra.mxu0 0.0
        %530 = vmatpush.xpose.msra.mxu0 0.0
        %531 = vmatpush.xpose.msra.mxu0 0.0
        %532 = vmatpush.xpose.msra.mxu0 0.0
        %533 = vmatpush.xpose.msra.mxu0 0.0
        %534 = vmatpush.xpose.msra.mxu0 0.0
        %535 = vmatpush.xpose.msra.mxu0 0.0
        %536 = vmatpush.xpose.msra.mxu0 0.0
        %537 = vmatpush.xpose.msra.mxu0 %v520
        %538 = vmatmul.f32.gmra.mxu0 %v518
        %v539 = vpop.f32.mrf.mxu0
        %v540 = vadd.f32 0.0, %v539
        %541 = vdwg.mxu0
        %v542 = vsel %vm315, %v540, -inf
        %543 = vmax.xlane.f32.xlu0 %v542
        %v544 = vpop.xlane.xlu0 %543
        %v545 = vsub.f32 %v540, %v544
        %v546 = vmul.f32 %v545, 1.442695
        %v547 = vpow.pop %v546
        %v548 = vsel %vm315, %v547, 0.0
        %549 = vadd.xlane.f32.xlu0 %v548
        %v550 = vpop.xlane.xlu0 %549
        %v551 = vrcp.pop %v550
        %v552 = vmul.f32 %v550, %v551
        %v553 = vsub.f32 1.0, %v552
        %v554 = vmul.f32 %v551, %v553
        %v555 = vadd.f32 %v551, %v554
        %vm556 = vweird.f32 %v550
        %vm557 = vweird.f32 %v551
        %vm558 = vmor %vm556, %vm557
        %v559 = vsel %vm558, %v551, %v555
        %v560 = vand.u32 2147483647, %v550
        %vm561 = vcmp.eq.f32.partialorder %v560, 8.507059e+37
        %v562 = vand.u32 %v550, 2147483648
        %v563 = vor.u32 1.1754944e-38, %v562
        %v564 = vsel %vm561, %v563, %v559
        %v565 = vmul.f32 %v547, %v564
        %566 = vrot.lane.b32.xlu0 %v306, 48
        %v567 = vpop.permute.xlu0 %566
        %v570 = vsel %vm315, %v565, 0
        %572 = vmatpush.msra.mxu0 0.0
        %573 = vmatpush.msra.mxu0 0.0
        %574 = vmatpush.msra.mxu0 0.0
        %575 = vmatpush.msra.mxu0 0.0
        %576 = vmatpush.msra.mxu0 0.0
        %577 = vmatpush.msra.mxu0 0.0
        %578 = vmatpush.msra.mxu0 0.0
        %579 = vmatpush.msra.mxu0 0.0
        %580 = vmatpush.msra.mxu0 0.0
        %581 = vmatpush.msra.mxu0 0.0
        %582 = vmatpush.msra.mxu0 0.0
        %583 = vmatpush.msra.mxu0 0.0
        %584 = vmatpush.msra.mxu0 0.0
        %585 = vmatpush.msra.mxu0 0.0
        %586 = vmatpush.msra.mxu0 0.0
        %587 = vmatpush.msra.mxu0 %v567
        %588 = vmatmul.f32.gmra.mxu0 %v570
        %v589 = vpop.f32.mrf.mxu0
        %v590 = vadd.f32 0.0, %v589
        %591 = vdwg.mxu0
        %v593 = vsel %vm315, %v590, 0
        %595 = vmatpush.msra.mxu0 0.0
        %596 = vmatpush.msra.mxu0 0.0
        %597 = vmatpush.msra.mxu0 0.0
        %598 = vmatpush.msra.mxu0 0.0
        %599 = vmatpush.msra.mxu0 0.0
        %600 = vmatpush.msra.mxu0 0.0
        %601 = vmatpush.msra.mxu0 0.0
        %602 = vmatpush.msra.mxu0 0.0
        %603 = vmatpush.msra.mxu0 0.0
        %604 = vmatpush.msra.mxu0 0.0
        %605 = vmatpush.msra.mxu0 0.0
        %606 = vmatpush.msra.mxu0 0.0
        %607 = vmatpush.msra.mxu0 0.0
        %608 = vmatpush.msra.mxu0 0.0
        %609 = vmatpush.msra.mxu0 0.0
        %610 = vmatpush.msra.mxu0 %v310
        %611 = vmatmul.f32.gmra.mxu0 %v593
        %v612 = vpop.f32.mrf.mxu0
        %v613 = vadd.f32 0.0, %v612
        %614 = vdwg.mxu0
        %v615 = vadd.f32 %v512, %v613
        %616 = vrot.lane.b32.xlu0 %v306, 104
        %v617 = vpop.permute.xlu0 %616
        %618 = vrot.lane.b32.xlu0 %v306, 72
        %v619 = vpop.permute.xlu0 %618
        %v620 = vsel %vm315, %v617, 0
        %v622 = vsel %vm315, %v619, 0
        %624 = vmatpush.xpose.msra.mxu0 0.0
        %625 = vmatpush.xpose.msra.mxu0 0.0
        %626 = vmatpush.xpose.msra.mxu0 0.0
        %627 = vmatpush.xpose.msra.mxu0 0.0
        %628 = vmatpush.xpose.msra.mxu0 0.0
        %629 = vmatpush.xpose.msra.mxu0 0.0
        %630 = vmatpush.xpose.msra.mxu0 0.0
        %631 = vmatpush.xpose.msra.mxu0 0.0
        %632 = vmatpush.xpose.msra.mxu0 0.0
        %633 = vmatpush.xpose.msra.mxu0 0.0
        %634 = vmatpush.xpose.msra.mxu0 0.0
        %635 = vmatpush.xpose.msra.mxu0 0.0
        %636 = vmatpush.xpose.msra.mxu0 0.0
        %637 = vmatpush.xpose.msra.mxu0 0.0
        %638 = vmatpush.xpose.msra.mxu0 0.0
        %639 = vmatpush.xpose.msra.mxu0 %v622
        %640 = vmatmul.f32.gmra.mxu0 %v620
        %v641 = vpop.f32.mrf.mxu0
        %v642 = vadd.f32 0.0, %v641
        %643 = vdwg.mxu0
        %v644 = vsel %vm315, %v642, -inf
        %645 = vmax.xlane.f32.xlu0 %v644
        %v646 = vpop.xlane.xlu0 %645
        %v647 = vsub.f32 %v642, %v646
        %v648 = vmul.f32 %v647, 1.442695
        %v649 = vpow.pop %v648
        %v650 = vsel %vm315, %v649, 0.0
        %651 = vadd.xlane.f32.xlu0 %v650
        %v652 = vpop.xlane.xlu0 %651
        %v653 = vrcp.pop %v652
        %v654 = vmul.f32 %v652, %v653
        %v655 = vsub.f32 1.0, %v654
        %v656 = vmul.f32 %v653, %v655
        %v657 = vadd.f32 %v653, %v656
        %vm658 = vweird.f32 %v652
        %vm659 = vweird.f32 %v653
        %vm660 = vmor %vm658, %vm659
        %v661 = vsel %vm660, %v653, %v657
        %v662 = vand.u32 2147483647, %v652
        %vm663 = vcmp.eq.f32.partialorder %v662, 8.507059e+37
        %v664 = vand.u32 %v652, 2147483648
        %v665 = vor.u32 1.1754944e-38, %v664
        %v666 = vsel %vm663, %v665, %v661
        %v667 = vmul.f32 %v649, %v666
        %668 = vrot.lane.b32.xlu0 %v306, 40
        %v669 = vpop.permute.xlu0 %668
        %v672 = vsel %vm315, %v667, 0
        %674 = vmatpush.msra.mxu0 0.0
        %675 = vmatpush.msra.mxu0 0.0
        %676 = vmatpush.msra.mxu0 0.0
        %677 = vmatpush.msra.mxu0 0.0
        %678 = vmatpush.msra.mxu0 0.0
        %679 = vmatpush.msra.mxu0 0.0
        %680 = vmatpush.msra.mxu0 0.0
        %681 = vmatpush.msra.mxu0 0.0
        %682 = vmatpush.msra.mxu0 0.0
        %683 = vmatpush.msra.mxu0 0.0
        %684 = vmatpush.msra.mxu0 0.0
        %685 = vmatpush.msra.mxu0 0.0
        %686 = vmatpush.msra.mxu0 0.0
        %687 = vmatpush.msra.mxu0 0.0
        %688 = vmatpush.msra.mxu0 0.0
        %689 = vmatpush.msra.mxu0 %v669
        %690 = vmatmul.f32.gmra.mxu0 %v672
        %v691 = vpop.f32.mrf.mxu0
        %v692 = vadd.f32 0.0, %v691
        %693 = vdwg.mxu0
        %v695 = vsel %vm315, %v692, 0
        %697 = vmatpush.msra.mxu0 0.0
        %698 = vmatpush.msra.mxu0 0.0
        %699 = vmatpush.msra.mxu0 0.0
        %700 = vmatpush.msra.mxu0 0.0
        %701 = vmatpush.msra.mxu0 0.0
        %702 = vmatpush.msra.mxu0 0.0
        %703 = vmatpush.msra.mxu0 0.0
        %704 = vmatpush.msra.mxu0 0.0
        %705 = vmatpush.msra.mxu0 0.0
        %706 = vmatpush.msra.mxu0 0.0
        %707 = vmatpush.msra.mxu0 0.0
        %708 = vmatpush.msra.mxu0 0.0
        %709 = vmatpush.msra.mxu0 0.0
        %710 = vmatpush.msra.mxu0 0.0
        %711 = vmatpush.msra.mxu0 0.0
        %712 = vmatpush.msra.mxu0 %v311
        %713 = vmatmul.f32.gmra.mxu0 %v695
        %v714 = vpop.f32.mrf.mxu0
        %v715 = vadd.f32 0.0, %v714
        %716 = vdwg.mxu0
        %v717 = vadd.f32 %v615, %v715
        %v718 = vld [vmem:[%s4] sm:$0x1]
        %v720 = vperm.slane %v718, 0
        %v722 = vadd.f32 %v717, %v720
        %723 = vst.msk [vmem:[%s274] sm:$0xff] %vm284, %v722
        %s724 = sand.u32 %s141, 1
        %s725 = scalar_lea.sflag [#allocation4], %s724
        %s726 = sand.u32 %s141, 1
        %s727 = smul.addr %s726, 8
        %s728 = scalar_lea.vmem [#allocation8], %s727
        // Predicated region
        $region53: #{tpu_custom_call.1} parent=39 // pred_check
          %p729 = pneg %p151
        $region54: #{tpu_custom_call.1} parent=39 // pred_check_branch
          %731 = sbr.rel (%p729) target = $region56
        $region55: #{tpu_custom_call.1} parent=39 // pred_region
          %733 = vsyncadd %s725, 0
          %s734 = smul.addr %s23, 8
          %s735 = scalar_lea.hbm %s5, %s734
          %s737 = sshll.u32 %s728, 4
          %s738 = int_to_ptr.vmem [resolvable:$true] %s737
          %s739 = sshll.u32 %s735, 4
          %s740 = int_to_ptr.hbm [resolvable:$true] %s739
          %742 = dma.vmem_to_hbm [thread:$0]  %s738, 128, %s740, %s725
        $region56: #{tpu_custom_call.1} parent=39 // pred_fallthru
          _
      $region40: #{tpu_custom_call.1} parent=5 // pred_fallthru
        _
      %p743 = scmp.le.s32.totalorder 2, %s18
      // Predicated region
      $region57: #{tpu_custom_call.1} parent=5 // pred_check
        %p744 = pneg %p743
      $region58: #{tpu_custom_call.1} parent=5 // pred_check_branch
        %746 = sbr.rel (%p744) target = $region60
      $region59: #{tpu_custom_call.1} parent=5 // pred_region
        %s747 = ssub.s32 %s18, 2
        // Predicated region
        $region61: #{tpu_custom_call.1} parent=59 // pred_check
          %p748 = pneg %p157
        $region62: #{tpu_custom_call.1} parent=59 // pred_check_branch
          %750 = sbr.rel (%p748) target = $region64
        $region63: #{tpu_custom_call.1} parent=59 // pred_region
          %s751 = sand.u32 %s142, 1
          %s752 = scalar_lea.sflag [#allocation4], %s751
          %s753 = sand.u32 %s142, 1
          %s754 = smul.addr %s753, 8
          %s755 = scalar_lea.vmem [#allocation8], %s754
          %757 = dma.done %s752, 128
        $region64: #{tpu_custom_call.1} parent=59 // pred_fallthru
          _
      $region60: #{tpu_custom_call.1} parent=5 // pred_fallthru
        _
    $region6: #{tpu_custom_call.1} parent=1 // loop_footer
      %s22 = sadd.s32 1, %s18
    $region7: #{tpu_custom_call.1} parent=1 // loop_footer_branch
      %17 = sbr.rel target = $region3
    $region8: #{tpu_custom_call.1} parent=1 // loop_exit
      _
    %758 = vsyncpa [#allocation3], 1
    %s759 = scalar_lea.sflag [#allocation3], 1
    %760 = vsyncpa %s759, 1
    %761 = vsyncpa [#allocation6], 1
    %762 = vsyncpa [#allocation4], 1
    %s763 = scalar_lea.sflag [#allocation4], 1
    %764 = vsyncpa %s763, 1

</llo_original>
